<compile_context>
chip_gen: v7x
topology: tpu7x:2x2x1
jax: 0.10.0
libtpu: 0.0.40
codegen_flags: <defaults>
</compile_context>

<pallas_src>
import functools

import jax
import jax.numpy as jnp
import numpy as np
from jax.experimental import pallas as pl
from jax.experimental.pallas import tpu as pltpu


def _layernorm(x, g, b, eps=1e-5):
    mu = jnp.mean(x, axis=-1, keepdims=True)
    var = jnp.mean((x - mu) ** 2, axis=-1, keepdims=True)
    return (x - mu) * jax.lax.rsqrt(var + eps) * g + b


# ---------------------------------------------------------------------------
# Pass 1: per (batch, seq-tile) compute fused [K|V] = x @ [Wk|Wv] + [bk|bv],
#         store V (bf16) and accumulate term1[b] = sum_T (K * V) in f32.
# ---------------------------------------------------------------------------
def _kv_kernel(x_ref, wkv_ref, bkv_ref, v_ref, t1_ref):
    k = pl.program_id(1)

    @pl.when(k == 0)
    def _():
        t1_ref[...] = jnp.zeros_like(t1_ref)

    D = v_ref.shape[-1]
    x_bf = x_ref[0].astype(jnp.bfloat16)                                    # [tq, D]
    kv = jnp.dot(x_bf, wkv_ref[...], preferred_element_type=jnp.float32) + bkv_ref[...]
    K = kv[:, :D]                                                           # [tq, D] f32
    V = kv[:, D:]                                                           # [tq, D] f32
    v_ref[0] = V.astype(v_ref.dtype)                                        # bf16 writeback
    # Sublane reduce over the seq tile; switch to a ones-row MXU matmul if the XLU ever
    # shows up as the binding slot (v6e).
    t1_ref[0] += jnp.sum(K * V, axis=0, keepdims=True)


# ---------------------------------------------------------------------------
# Pass 2: attention epilogue + layernorm + top-2 gating at eb==0, then a block
#         of experts per grid step (all experts in one block when they fit VMEM),
#         accumulated into a VMEM scratch; final layernorm at eb==last.
# ---------------------------------------------------------------------------
def _moe_layer_kernel(x_ref, pb_ref, v_ref, t1_ref,
                      wo_ref, bo_ref, ln1g_ref, ln1b_ref,
                      wg_ref, bg_ref,
                      w1_ref, b1_ref, w2_ref, b2_ref,
                      ln2g_ref, ln2b_ref,
                      o_ref,
                      x1_s, wexp_s, acc_s,
                      *, experts_per_block):
    eb = pl.program_id(2)
    n_eb = pl.num_programs(2)

    @pl.when(eb == 0)
    def _():
        xq = x_ref[0]                                           # [tq, D] f32
        # term2 = pb @ V  (both already bf16) + term1 broadcast
        term2 = jnp.dot(pb_ref[0], v_ref[0], preferred_element_type=jnp.float32)
        weighted = term2 + t1_ref[0]                            # [tq, D]
        out_attn = jnp.dot(weighted.astype(jnp.bfloat16), wo_ref[...],
                           preferred_element_type=jnp.float32) + bo_ref[...]
        x1 = _layernorm(xq + out_attn, ln1g_ref[...], ln1b_ref[...])
        x1_s[...] = x1

        # ---- top-2 gating (f32: tiny matmul, keeps routing stable) ----
        logits = jnp.dot(x1, wg_ref[...], preferred_element_type=jnp.float32) + bg_ref[...]
        logits = logits - jnp.max(logits, axis=-1, keepdims=True)
        ex = jnp.exp(logits)
        probs = ex / jnp.sum(ex, axis=-1, keepdims=True)        # [tq, E]
        E = probs.shape[-1]
        eidx = jax.lax.broadcasted_iota(jnp.int32, probs.shape, 1)
        max1 = jnp.max(probs, axis=-1, keepdims=True)
        idx1 = jnp.min(jnp.where(probs == max1, eidx, E), axis=-1, keepdims=True)
        mask1 = eidx == idx1                                    # first occurrence, like torch.topk
        probs_m = jnp.where(mask1, -jnp.inf, probs)
        max2 = jnp.max(probs_m, axis=-1, keepdims=True)
        idx2 = jnp.min(jnp.where(probs_m == max2, eidx, E), axis=-1, keepdims=True)
        mask2 = eidx == idx2
        wexp_s[...] = jnp.where(mask1, max1, 0.0) + jnp.where(mask2, max2, 0.0)
        acc_s[...] = jnp.zeros_like(acc_s)

    # ---- experts of this block: [tq,D]@[D,FF] -> relu -> [tq,FF]@[FF,D] ----
    x1_bf = x1_s[...].astype(jnp.bfloat16)
    eiota = jax.lax.broadcasted_iota(jnp.int32, wexp_s.shape, 1)
    for e_local in range(experts_per_block):                    # static unrolled loop
        eg = eb * experts_per_block + e_local                   # global expert index
        gate = jnp.sum(jnp.where(eiota == eg, wexp_s[...], 0.0),
                       axis=-1, keepdims=True)                  # [tq, 1]

        @pl.when(jnp.max(gate) > 0.0)                           # skip unused experts
        def _(e_local=e_local, gate=gate):
            h = jnp.dot(x1_bf, w1_ref[e_local],
                        preferred_element_type=jnp.float32) + b1_ref[e_local]
            h = jnp.maximum(h, 0.0)
            oe = jnp.dot(h.astype(jnp.bfloat16), w2_ref[e_local],
                         preferred_element_type=jnp.float32) + b2_ref[e_local]
            acc_s[...] += gate * oe

    @pl.when(eb == n_eb - 1)
    def _():
        o_ref[0] = _layernorm(x1_s[...] + acc_s[...],
                              ln2g_ref[...], ln2b_ref[...]).astype(o_ref.dtype)


# ---------------------------------------------------------------------------
# Wrapper
# ---------------------------------------------------------------------------
def _nbytes(shape, dt):
    return int(np.prod(shape)) * jnp.dtype(dt).itemsize


def _physical_vmem_bytes():
    try:
        cap = getattr(pltpu.get_tpu_info(), "vmem_capacity_bytes", None)
        if cap:
            return int(cap)
    except Exception:
        pass
    return 64 << 20   # conservative: v7x per-TensorCore VMEM


def _vmem_limit(tile_bytes, cap):
    # 2x for double buffering of pipelined tiles + headroom for padding/internal scratch,
    # clamped below the chip's physical VMEM.
    want = 2 * tile_bytes + (8 << 20)
    ceiling = max(cap - (2 << 20), 16 << 20)
    return int(min(ceiling, max(32 << 20, want)))


def fourier_moe_layer(x, pb, params, *, num_experts, tile_q=None, out_dtype=None,
                      expert_resident_budget=16 << 20):
    B, T, D = x.shape
    E = num_experts
    FF = params["w1"].shape[-1]
    assert D % 128 == 0, "model_dim must be a multiple of 128 (lane-dense output)"
    tq = tile_q if tile_q is not None else min(T, 256)
    assert T % tq == 0 and tq % 8 == 0
    nq = T // tq
    out_dtype = out_dtype if out_dtype is not None else x.dtype

    bf16, f32 = jnp.bfloat16, jnp.float32
    cap = _physical_vmem_bytes()

    # Heavy matmul operands in bf16; biases / layernorm / gate stay f32.
    wk, wv, wo = (params[k].astype(bf16) for k in ("wk", "wv", "wo"))
    w1, w2 = params["w1"].astype(bf16), params["w2"].astype(bf16)
    wkv = jnp.concatenate([wk, wv], axis=1)                        # [D, 2D] bf16 (fused K|V)
    bkv = jnp.concatenate([params["bk"], params["bv"]], axis=1)    # [1, 2D] f32
    bo = params["bo"]
    ln1g, ln1b, ln2g, ln2b = params["ln1g"], params["ln1b"], params["ln2g"], params["ln2b"]
    wg, bg, b1, b2 = params["wg"], params["bg"], params["b1"], params["b2"]
    pb_bf = pb.astype(bf16)                                        # halves pb DMA / residency

    # ------------------------- pass 1: V (bf16) and term1 (f32) -------------------------
    tiles1 = (_nbytes((tq, D), f32) + _nbytes((D, 2 * D), bf16) + _nbytes((1, 2 * D), f32)
              + _nbytes((tq, D), bf16) + _nbytes((1, D), f32))
    V, t1 = pl.pallas_call(
        _kv_kernel,
        out_shape=(jax.ShapeDtypeStruct((B, T, D), bf16),
                   jax.ShapeDtypeStruct((B, 1, D), f32)),
        grid=(B, nq),
        in_specs=[
            pl.BlockSpec((1, tq, D), lambda b, k: (b, k, 0)),
            pl.BlockSpec((D, 2 * D), lambda b, k: (0, 0)),
            pl.BlockSpec((1, 2 * D), lambda b, k: (0, 0)),
        ],
        out_specs=(pl.BlockSpec((1, tq, D), lambda b, k: (b, k, 0)),
                   pl.BlockSpec((1, 1, D), lambda b, k: (b, 0, 0))),
        compiler_params=pltpu.CompilerParams(
            dimension_semantics=("parallel", "arbitrary"),
            vmem_limit_bytes=_vmem_limit(tiles1, cap)),
    )(x, wkv, bkv)

    # ------------- pass 2: attention epilogue + top-2 MoE (experts resident if small) -------------
    expert_bytes = (_nbytes((E, D, FF), bf16) + _nbytes((E, FF, D), bf16)
                    + _nbytes((E, 1, FF), f32) + _nbytes((E, 1, D), f32))
    # Resident (single block, weights DMA'd once) when the double-buffered slab fits the budget.
    epb = E if 2 * expert_bytes <= expert_resident_budget else 1
    n_eb = E // epb

    tiles2 = (_nbytes((tq, D), f32) + _nbytes((tq, T), bf16) + _nbytes((T, D), bf16)
              + _nbytes((1, D), f32)
              + _nbytes((D, D), bf16) + 5 * _nbytes((1, D), f32)
              + _nbytes((D, E), f32) + _nbytes((1, E), f32)
              + _nbytes((epb, D, FF), bf16) + _nbytes((epb, 1, FF), f32)
              + _nbytes((epb, FF, D), bf16) + _nbytes((epb, 1, D), f32)
              + _nbytes((tq, D), jnp.dtype(out_dtype))                    # output tile
              + 2 * _nbytes((tq, D), f32) + _nbytes((tq, E), f32))        # scratch

    kernel = functools.partial(_moe_layer_kernel, experts_per_block=epb)
    out = pl.pallas_call(
        kernel,
        out_shape=jax.ShapeDtypeStruct((B, T, D), out_dtype),
        grid=(B, nq, n_eb),
        in_specs=[
            pl.BlockSpec((1, tq, D), lambda b, q, e: (b, q, 0)),   # x query tile (f32)
            pl.BlockSpec((1, tq, T), lambda b, q, e: (b, q, 0)),   # positional bias rows (bf16)
            pl.BlockSpec((1, T, D), lambda b, q, e: (b, 0, 0)),    # V (full seq, bf16)
            pl.BlockSpec((1, 1, D), lambda b, q, e: (b, 0, 0)),    # term1
            pl.BlockSpec((D, D), lambda b, q, e: (0, 0)),          # wo
            pl.BlockSpec((1, D), lambda b, q, e: (0, 0)),          # bo
            pl.BlockSpec((1, D), lambda b, q, e: (0, 0)),          # ln1 gamma
            pl.BlockSpec((1, D), lambda b, q, e: (0, 0)),          # ln1 beta
            pl.BlockSpec((D, E), lambda b, q, e: (0, 0)),          # gate W
            pl.BlockSpec((1, E), lambda b, q, e: (0, 0)),          # gate b
            pl.BlockSpec((epb, D, FF), lambda b, q, e: (e, 0, 0)), # w1 block
            pl.BlockSpec((epb, 1, FF), lambda b, q, e: (e, 0, 0)), # b1 block
            pl.BlockSpec((epb, FF, D), lambda b, q, e: (e, 0, 0)), # w2 block
            pl.BlockSpec((epb, 1, D), lambda b, q, e: (e, 0, 0)),  # b2 block
            pl.BlockSpec((1, D), lambda b, q, e: (0, 0)),          # ln2 gamma
            pl.BlockSpec((1, D), lambda b, q, e: (0, 0)),          # ln2 beta
        ],
        out_specs=pl.BlockSpec((1, tq, D), lambda b, q, e: (b, q, 0)),
        scratch_shapes=[pltpu.VMEM((tq, D), f32),   # x1 (post-attn layernorm)
                        pltpu.VMEM((tq, E), f32),   # per-expert combine weights
                        pltpu.VMEM((tq, D), f32)],  # ff accumulator
        compiler_params=pltpu.CompilerParams(
            dimension_semantics=("parallel", "parallel", "arbitrary"),
            vmem_limit_bytes=_vmem_limit(tiles2, cap)),
    )(x, pb_bf, V, t1, wo, bo, ln1g, ln1b, wg, bg, w1, b1, w2, b2, ln2g, ln2b)
    return out


# ------------- pure-JAX reference (mirrors the PyTorch forward, eval mode) -------------
# matmul_dtype=bfloat16 gives a precision-matched reference for the bf16 kernel.
def reference(x, pb, p, num_experts, matmul_dtype=jnp.float32):
    md = matmul_dtype

    def mm(a, b):
        return jnp.dot(a.astype(md), b.astype(md), preferred_element_type=jnp.float32)

    K = mm(x, p["wk"]) + p["bk"]
    V = mm(x, p["wv"]) + p["bv"]
    term1 = jnp.sum(K * V, axis=1, keepdims=True)
    term2 = jnp.einsum("bij,bjd->bid", pb.astype(md), V.astype(md),
                       preferred_element_type=jnp.float32)
    out_attn = mm(term1 + term2, p["wo"]) + p["bo"]
    x1 = _layernorm(x + out_attn, p["ln1g"], p["ln1b"])

    probs = jax.nn.softmax(jnp.dot(x1, p["wg"], preferred_element_type=jnp.float32)
                           + p["bg"], axis=-1)
    top2_s, top2_i = jax.lax.top_k(probs, 2)
    out = jnp.zeros_like(x1)
    for rank in range(2):
        w = top2_s[..., rank]
        idx = top2_i[..., rank]
        for e in range(num_experts):
            m = (idx == e).astype(x1.dtype)[..., None]
            h = jnp.maximum(mm(x1, p["w1"][e]) + p["b1"][e], 0.0)
            oe = mm(h, p["w2"][e]) + p["b2"][e]
            out = out + m * w[..., None] * oe
    return _layernorm(x1 + out, p["ln2g"], p["ln2b"])


def make_params(key, D, FF, E):
    ks = jax.random.split(key, 12)
    s = 0.05
    return {
        "wk": jax.random.normal(ks[0], (D, D), jnp.float32) * s,
        "bk": jax.random.normal(ks[1], (1, D), jnp.float32) * s,
        "wv": jax.random.normal(ks[2], (D, D), jnp.float32) * s,
        "bv": jax.random.normal(ks[3], (1, D), jnp.float32) * s,
        "wo": jax.random.normal(ks[4], (D, D), jnp.float32) * s,
        "bo": jax.random.normal(ks[5], (1, D), jnp.float32) * s,
        "ln1g": jnp.ones((1, D), jnp.float32),
        "ln1b": jnp.zeros((1, D), jnp.float32),
        "wg": jax.random.normal(ks[6], (D, E), jnp.float32) * s,
        "bg": jax.random.normal(ks[7], (1, E), jnp.float32) * s,
        "w1": jax.random.normal(ks[8], (E, D, FF), jnp.float32) * s,
        "b1": jax.random.normal(ks[9], (E, 1, FF), jnp.float32) * s,
        "w2": jax.random.normal(ks[10], (E, FF, D), jnp.float32) * s,
        "b2": jax.random.normal(ks[11], (E, 1, D), jnp.float32) * s,
        "ln2g": jnp.ones((1, D), jnp.float32),
        "ln2b": jnp.zeros((1, D), jnp.float32),
    }


if __name__ == "__main__":
    # Small demo shapes; D is 128 so the model dim is lane-dense and tq=128 fills the MXU M-dim.
    B, T, D = 2, 256, 128
    num_heads = 4          # head split is algebraically a no-op here (see derivation above)
    FF, E = 256, 4
    assert D % num_heads == 0

    key = jax.random.PRNGKey(0)
    kx, kpb, kp = jax.random.split(key, 3)
    x = jax.random.normal(kx, (B, T, D), jnp.float32)
    pb = jax.random.normal(kpb, (B, T, T), jnp.float32)
    params = make_params(kp, D, FF, E)

    out = fourier_moe_layer(x, pb, params, num_experts=E, tile_q=128)
    out = jax.block_until_ready(out)

    # Compare against a precision-matched (bf16 matmul operands, f32 accumulation) reference.
    ref = jax.block_until_ready(reference(x, pb, params, E, matmul_dtype=jnp.bfloat16))
    np.testing.assert_allclose(np.asarray(out), np.asarray(ref), rtol=2e-2, atol=2e-2)

    print("KERNEL_OK")
</pallas_src>

<mosaic_0001>
module attributes {stable_mosaic.version = 11 : i64} {
  func.func @_kv_kernel(%arg0: i32, %arg1: i32, %arg2: memref<1x128x128xf32, #tpu.memory_space<vmem>>, %arg3: memref<128x256xbf16, #tpu.memory_space<vmem>>, %arg4: memref<1x256xf32, #tpu.memory_space<vmem>>, %arg5: memref<1x128x128xbf16, #tpu.memory_space<vmem>>, %arg6: memref<1x1x128xf32, #tpu.memory_space<vmem>>) attributes {dimension_semantics = [#tpu.dimension_semantics<parallel>, #tpu.dimension_semantics<arbitrary>], iteration_bounds = array<i64: 2, 2>, scalar_prefetch = 0 : i64, scratch_operands = 0 : i64, tpu.core_type = #tpu.core_type<tc>, window_params = [{transform_indices = @transform_0, window_bounds = array<i64: 1, 128, 128>}, {pipeline_mode = #tpu.pipeline_mode<synchronous>, transform_indices = @transform_1, window_bounds = array<i64: 128, 256>}, {pipeline_mode = #tpu.pipeline_mode<synchronous>, transform_indices = @transform_2, window_bounds = array<i64: 1, 256>}, {transform_indices = @transform_3, window_bounds = array<i64: 1, 128, 128>}, {transform_indices = @transform_4, window_bounds = array<i64: 1, 1, 128>}]} {
    %c0_i32 = arith.constant 0 : i32
    %0 = arith.cmpi eq, %arg1, %c0_i32 : i32
    %1 = arith.extui %0 : i1 to i32
    %c0_i32_0 = arith.constant 0 : i32
    %2 = arith.cmpi ne, %1, %c0_i32_0 : i32
    scf.if %2 {
      %cst_17 = arith.constant 0.000000e+00 : f32
      %26 = vector.broadcast %cst_17 : f32 to vector<1x1x128xf32>
      %c0_18 = arith.constant 0 : index
      %c0_19 = arith.constant 0 : index
      %c0_20 = arith.constant 0 : index
      %27 = vector.load %arg6[%c0_18, %c0_19, %c0_20] : memref<1x1x128xf32, #tpu.memory_space<vmem>>, vector<1x1x128xf32>
      tpu.vector_store %arg6[%c0_18, %c0_19, %c0_20], %26 {strides = array<i32>} : memref<1x1x128xf32, #tpu.memory_space<vmem>>, vector<1x1x128xf32>,
    } else {
    }
    %c0 = arith.constant 0 : index
    %c0_1 = arith.constant 0 : index
    %c0_2 = arith.constant 0 : index
    %3 = vector.load %arg2[%c0, %c0_1, %c0_2] : memref<1x128x128xf32, #tpu.memory_space<vmem>>, vector<1x128x128xf32>
    %4 = vector.shape_cast %3 : vector<1x128x128xf32> to vector<128x128xf32>
    %5 = arith.truncf %4 : vector<128x128xf32> to vector<128x128xbf16>
    %c0_3 = arith.constant 0 : index
    %c0_4 = arith.constant 0 : index
    %6 = vector.load %arg3[%c0_3, %c0_4] : memref<128x256xbf16, #tpu.memory_space<vmem>>, vector<128x256xbf16>
    %cst = arith.constant dense<0.000000e+00> : vector<128x256xf32>
    %7 = tpu.matmul %5, %6, %cst {dimension_numbers = #tpu.dot_dimension_numbers<[1], [0], [0], [1], [0, 0, 1, 1], [], []>} : vector<128x128xbf16>, vector<128x256xbf16>, vector<128x256xf32> -> vector<128x256xf32>
    %c0_5 = arith.constant 0 : index
    %c0_6 = arith.constant 0 : index
    %8 = vector.load %arg4[%c0_5, %c0_6] : memref<1x256xf32, #tpu.memory_space<vmem>>, vector<1x256xf32>
    %9 = vector.broadcast %8 : vector<1x256xf32> to vector<128x256xf32>
    %10 = arith.addf %7, %9 : vector<128x256xf32>
    %11 = vector.extract_strided_slice %10 {offsets = [0, 0], sizes = [128, 128], strides = [1, 1]} : vector<128x256xf32> to vector<128x128xf32>
    %12 = vector.extract_strided_slice %10 {offsets = [0, 128], sizes = [128, 128], strides = [1, 1]} : vector<128x256xf32> to vector<128x128xf32>
    %13 = arith.truncf %12 : vector<128x128xf32> to vector<128x128xbf16>
    %c0_7 = arith.constant 0 : index
    %c0_8 = arith.constant 0 : index
    %c0_9 = arith.constant 0 : index
    %14 = vector.load %arg5[%c0_7, %c0_8, %c0_9] : memref<1x128x128xbf16, #tpu.memory_space<vmem>>, vector<1x128x128xbf16>
    %15 = vector.shape_cast %14 : vector<1x128x128xbf16> to vector<128x128xbf16>
    %16 = vector.shape_cast %13 : vector<128x128xbf16> to vector<1x128x128xbf16>
    tpu.vector_store %arg5[%c0_7, %c0_8, %c0_9], %16 {strides = array<i32>} : memref<1x128x128xbf16, #tpu.memory_space<vmem>>, vector<1x128x128xbf16>,
    %c0_10 = arith.constant 0 : index
    %c0_11 = arith.constant 0 : index
    %c0_12 = arith.constant 0 : index
    %17 = vector.load %arg6[%c0_10, %c0_11, %c0_12] : memref<1x1x128xf32, #tpu.memory_space<vmem>>, vector<1x1x128xf32>
    %18 = vector.shape_cast %17 : vector<1x1x128xf32> to vector<1x128xf32>
    %19 = arith.mulf %11, %12 : vector<128x128xf32>
    %cst_13 = arith.constant dense<0.000000e+00> : vector<128xf32>
    %20 = vector.multi_reduction <add>, %19, %cst_13 [0] : vector<128x128xf32> to vector<128xf32>
    %21 = vector.shape_cast %20 : vector<128xf32> to vector<1x128xf32>
    %22 = arith.addf %18, %21 : vector<1x128xf32>
    %c0_14 = arith.constant 0 : index
    %c0_15 = arith.constant 0 : index
    %c0_16 = arith.constant 0 : index
    %23 = vector.load %arg6[%c0_14, %c0_15, %c0_16] : memref<1x1x128xf32, #tpu.memory_space<vmem>>, vector<1x1x128xf32>
    %24 = vector.shape_cast %23 : vector<1x1x128xf32> to vector<1x128xf32>
    %25 = vector.shape_cast %22 : vector<1x128xf32> to vector<1x1x128xf32>
    tpu.vector_store %arg6[%c0_14, %c0_15, %c0_16], %25 {strides = array<i32>} : memref<1x1x128xf32, #tpu.memory_space<vmem>>, vector<1x1x128xf32>,
    return
  }
  func.func @transform_0(%arg0: i32, %arg1: i32) -> (i32, i32, i32) {
    %c0_i32 = arith.constant 0 : i32
    %c0_i32_0 = arith.constant 0 : i32
    return %arg0, %arg1, %c0_i32 : i32, i32, i32
  }
  func.func @transform_1(%arg0: i32, %arg1: i32) -> (i32, i32) {
    %c0_i32 = arith.constant 0 : i32
    %c0_i32_0 = arith.constant 0 : i32
    %c0_i32_1 = arith.constant 0 : i32
    return %c0_i32, %c0_i32_0 : i32, i32
  }
  func.func @transform_2(%arg0: i32, %arg1: i32) -> (i32, i32) {
    %c0_i32 = arith.constant 0 : i32
    %c0_i32_0 = arith.constant 0 : i32
    %c0_i32_1 = arith.constant 0 : i32
    return %c0_i32, %c0_i32_0 : i32, i32
  }
  func.func @transform_3(%arg0: i32, %arg1: i32) -> (i32, i32, i32) {
    %c0_i32 = arith.constant 0 : i32
    %c0_i32_0 = arith.constant 0 : i32
    return %arg0, %arg1, %c0_i32 : i32, i32, i32
  }
  func.func @transform_4(%arg0: i32, %arg1: i32) -> (i32, i32, i32) {
    %c0_i32 = arith.constant 0 : i32
    %c0_i32_0 = arith.constant 0 : i32
    %c0_i32_1 = arith.constant 0 : i32
    return %arg0, %c0_i32, %c0_i32_0 : i32, i32, i32
  }
}

</mosaic_0001>

<llo_original>
// kernel: tpu_custom_call.1
$region0: #{tpu_custom_call.1}
  #allocation0 [shape = 'u32[]', space=smem, size = 0x4, offset = 0x4, fixed_abs, tag = 'smem constant byte address 0x4 - core index']
  #allocation1 [shape = 'u32[144,128]{1,0:T(1,128)}', space=vmem, size = 0x12000, scoped, tag = 'internal scratch']
  %s0 = inlined_call_operand.hbm [shape: f32[2,256,128], index: 0, kind: input, shape index: {}]
  %s1 = inlined_call_operand.hbm [shape: bf16[128,256], index: 1, kind: input, shape index: {}]
  %s2 = inlined_call_operand.vmem [shape: f32[1,256], index: 2, kind: input, shape index: {}]
  %s3 = inlined_call_operand.hbm [shape: bf16[2,256,128], index: 3, kind: output, shape index: {0}]
  %s4 = inlined_call_operand.hbm [shape: f32[2,1,128], index: 4, kind: output, shape index: {1}]
  %5 = xla_tuple %s3, %s4
  %s6 = sld [smem:[#allocation0]]
  $region65: #{tpu_custom_call.1} parent=0
    _
  %s8 = ssub.s32 1, %s6
  %s9 = scalar_select 0, %s8, %s6
  $region1: #{tpu_custom_call.1} parent=0
    #allocation2 [shape = 'u8[131072]{0}', space=vmem, size = 0x20000, scoped, tag = 'input window, operand 0']
    #allocation3 [shape = 's32[2]{0}', space=sflag, size = 0x8, scoped, tag = 'scoped memory for tpu_custom_call.1']
    #allocation4 [shape = 's32[2]{0}', space=sflag, size = 0x8, scoped, tag = 'scoped memory for tpu_custom_call.1']
    #allocation5 [shape = 'u8[65536]{0}', space=vmem, size = 0x10000, scoped, tag = 'input window, operand 1, single buffered']
    #allocation6 [shape = 's32[1]{0}', space=sflag, size = 0x4, scoped, tag = 'scoped memory for tpu_custom_call.1']
    #allocation7 [shape = 'u8[65536]{0}', space=vmem, size = 0x10000, scoped, tag = 'output window, operand 0']
    #allocation8 [shape = 'u8[1024]{0}', space=vmem, size = 0x400, scoped, tag = 'output window, operand 1']
    #allocation9 [shape = 's32[2]{0}', space=sflag, size = 0x8, scoped, tag = 'scoped memory for tpu_custom_call.1']
    %10 = vsyncpa [#allocation3], 0
    %s11 = scalar_lea.sflag [#allocation3], 1
    %12 = vsyncpa %s11, 0
    %13 = vsyncpa [#allocation6], 0
    %14 = vsyncpa [#allocation4], 0
    %s15 = scalar_lea.sflag [#allocation4], 1
    %16 = vsyncpa %s15, 0
    %17 = vsyncpa [#allocation9], 0
    %s18 = scalar_lea.sflag [#allocation9], 1
    %19 = vsyncpa %s18, 0
    loop: start=0, step=1, limit=6
    $region2: #{tpu_custom_call.1} parent=1 // loop_pre_header
      _
    $region3: #{tpu_custom_call.1} parent=1 // loop_header
      %s21 = sphi 0, %s25
      %p22 = scmp.ge.s32.totalorder %s21, 6
      %s28 = sphi 0, %s40
      %s29 = sphi 0, %s36
      %s30 = sphi 0, %s28
      %s31 = sphi 0, %s29
      %s32 = sphi 0, %s30
      %s33 = sphi 0, %s31
      %s45 = sphi 0, %s47
      %s48 = sphi 0, %s45
      %s49 = sphi 0, %s48
      %s65 = sphi 0, %s49
      %s69 = sphi 0, %s69
      %s71 = sphi 0, %s69
      %s72 = sphi 0, %s71
      %s86 = sphi 0, %s72
      %s90 = sphi 0, %s90
      %s92 = sphi 0, %s90
      %s93 = sphi 0, %s92
      %s107 = sphi 0, %s93
      %s115 = sphi 0, %s117
      %s118 = sphi 0, %s115
      %s119 = sphi 0, %s118
      %s135 = sphi 0, %s119
      %s141 = sphi 0, %s143
      %s144 = sphi 0, %s141
      %s145 = sphi 0, %s144
      %s161 = sphi 0, %s145
    $region4: #{tpu_custom_call.1} parent=1 // loop_header_branch
      %24 = sbr.rel (%p22) target = $region8
    $region5: #{tpu_custom_call.1} parent=1 // loop_body
      %s26 = ssub.s32 %s21, 1
      %s27 = ssub.s32 %s21, 2
      %s34 = sadd.s32 1, %s29
      %p35 = scmp.ge.s32.totalorder %s34, 2
      %s36 = scalar_select %p35, 0, %s34
      %s37 = sadd.s32 1, %s28
      %s38 = scalar_select %p35, %s37, %s28
      %p39 = scmp.ge.s32.totalorder %s38, 2
      %s40 = scalar_select %p39, 0, %s38
      %s41 = ssub.s32 %s28, %s40
      %s42 = ssub.s32 %s29, %s36
      %s43 = sor.u32 %s41, %s42
      %p44 = scmp.eq.s32.totalorder %s43, 0
      %s46 = sadd.s32 %s45, 1
      %s47 = scalar_select %p44, %s45, %s46
      %p50 = pneg %p44
      %p51 = scmp.eq.s32.totalorder %s21, 3
      %p52 = por %p50, %p51
      %p53 = scmp.ne.s32.totalorder %s45, %s48
      %p54 = scmp.eq.s32.totalorder %s21, 0
      %p55 = por %p53, %p54
      %p56 = scmp.ne.s32.totalorder %s45, %s48
      %p57 = scmp.eq.s32.totalorder %s26, 3
      %p58 = por %p56, %p57
      %p59 = scmp.ne.s32.totalorder %s48, %s49
      %p60 = scmp.eq.s32.totalorder %s26, 0
      %p61 = por %p59, %p60
      %p62 = scmp.ne.s32.totalorder %s48, %s49
      %p63 = scmp.eq.s32.totalorder %s27, 3
      %p64 = por %p62, %p63
      %p66 = scmp.ne.s32.totalorder %s49, %s65
      %p67 = scmp.eq.s32.totalorder %s27, 0
      %p68 = por %p66, %p67
      %s70 = sadd.s32 %s69, 1
      %p73 = scmp.eq.s32.totalorder %s21, 3
      %p74 = scmp.ne.s32.totalorder %s69, %s71
      %p75 = scmp.eq.s32.totalorder %s21, 0
      %p76 = por %p74, %p75
      %p77 = scmp.ne.s32.totalorder %s69, %s71
      %p78 = scmp.eq.s32.totalorder %s26, 3
      %p79 = por %p77, %p78
      %p80 = scmp.ne.s32.totalorder %s71, %s72
      %p81 = scmp.eq.s32.totalorder %s26, 0
      %p82 = por %p80, %p81
      %p83 = scmp.ne.s32.totalorder %s71, %s72
      %p84 = scmp.eq.s32.totalorder %s27, 3
      %p85 = por %p83, %p84
      %p87 = scmp.ne.s32.totalorder %s72, %s86
      %p88 = scmp.eq.s32.totalorder %s27, 0
      %p89 = por %p87, %p88
      %s91 = sadd.s32 %s90, 1
      %p94 = scmp.eq.s32.totalorder %s21, 3
      %p95 = scmp.ne.s32.totalorder %s90, %s92
      %p96 = scmp.eq.s32.totalorder %s21, 0
      %p97 = por %p95, %p96
      %p98 = scmp.ne.s32.totalorder %s90, %s92
      %p99 = scmp.eq.s32.totalorder %s26, 3
      %p100 = por %p98, %p99
      %p101 = scmp.ne.s32.totalorder %s92, %s93
      %p102 = scmp.eq.s32.totalorder %s26, 0
      %p103 = por %p101, %p102
      %p104 = scmp.ne.s32.totalorder %s92, %s93
      %p105 = scmp.eq.s32.totalorder %s27, 3
      %p106 = por %p104, %p105
      %p108 = scmp.ne.s32.totalorder %s93, %s107
      %p109 = scmp.eq.s32.totalorder %s27, 0
      %p110 = por %p108, %p109
      %s111 = ssub.s32 %s28, %s40
      %s112 = ssub.s32 %s29, %s36
      %s113 = sor.u32 %s111, %s112
      %p114 = scmp.eq.s32.totalorder %s113, 0
      %s116 = sadd.s32 %s115, 1
      %s117 = scalar_select %p114, %s115, %s116
      %p120 = pneg %p114
      %p121 = scmp.eq.s32.totalorder %s21, 3
      %p122 = por %p120, %p121
      %p123 = scmp.ne.s32.totalorder %s115, %s118
      %p124 = scmp.eq.s32.totalorder %s21, 0
      %p125 = por %p123, %p124
      %p126 = scmp.ne.s32.totalorder %s115, %s118
      %p127 = scmp.eq.s32.totalorder %s26, 3
      %p128 = por %p126, %p127
      %p129 = scmp.ne.s32.totalorder %s118, %s119
      %p130 = scmp.eq.s32.totalorder %s26, 0
      %p131 = por %p129, %p130
      %p132 = scmp.ne.s32.totalorder %s118, %s119
      %p133 = scmp.eq.s32.totalorder %s27, 3
      %p134 = por %p132, %p133
      %p136 = scmp.ne.s32.totalorder %s119, %s135
      %p137 = scmp.eq.s32.totalorder %s27, 0
      %p138 = por %p136, %p137
      %s139 = ssub.s32 %s28, %s40
      %p140 = scmp.eq.s32.totalorder %s139, 0
      %s142 = sadd.s32 %s141, 1
      %s143 = scalar_select %p140, %s141, %s142
      %p146 = pneg %p140
      %p147 = scmp.eq.s32.totalorder %s21, 3
      %p148 = por %p146, %p147
      %p149 = scmp.ne.s32.totalorder %s141, %s144
      %p150 = scmp.eq.s32.totalorder %s21, 0
      %p151 = por %p149, %p150
      %p152 = scmp.ne.s32.totalorder %s141, %s144
      %p153 = scmp.eq.s32.totalorder %s26, 3
      %p154 = por %p152, %p153
      %p155 = scmp.ne.s32.totalorder %s144, %s145
      %p156 = scmp.eq.s32.totalorder %s26, 0
      %p157 = por %p155, %p156
      %p158 = scmp.ne.s32.totalorder %s144, %s145
      %p159 = scmp.eq.s32.totalorder %s27, 3
      %p160 = por %p158, %p159
      %p162 = scmp.ne.s32.totalorder %s145, %s161
      %p163 = scmp.eq.s32.totalorder %s27, 0
      %p164 = por %p162, %p163
      %p165 = scmp.le.s32.totalorder 1, %s21
      %p166 = scmp.lt.s32.totalorder %s21, 5
      %p167 = pnand %p165, %p166
      %p168 = pneg %p167
      // Predicated region
      $region9: #{tpu_custom_call.1} parent=5 // pred_check
        _
      $region10: #{tpu_custom_call.1} parent=5 // pred_check_branch
        %170 = sbr.rel (%p167) target = $region12
      $region11: #{tpu_custom_call.1} parent=5 // pred_region
        %s171 = ssub.s32 %s21, 1
        // Predicated region
        $region13: #{tpu_custom_call.1} parent=11 // pred_check
          %p172 = pneg %p82
        $region14: #{tpu_custom_call.1} parent=11 // pred_check_branch
          %174 = sbr.rel (%p172) target = $region16
        $region15: #{tpu_custom_call.1} parent=11 // pred_region
          %s176 = ssub.s32 2048, 2048
          %177 = vsyncadd [#allocation6], %s176
          %s178 = sshll.u32 [#allocation5], 4
          %s179 = int_to_ptr.vmem [resolvable:$true] %s178
          %184 = dma.hbm_to_vmem [thread:$0]  %s1, 2048, %s179, [#allocation6], 128, 128, 8
        $region16: #{tpu_custom_call.1} parent=11 // pred_fallthru
          _
        // Predicated region
        $region17: #{tpu_custom_call.1} parent=11 // pred_check
          %p185 = pneg %p103
        $region18: #{tpu_custom_call.1} parent=11 // pred_check_branch
          %187 = sbr.rel (%p185) target = $region20
        $region19: #{tpu_custom_call.1} parent=11 // pred_region
          _
        $region20: #{tpu_custom_call.1} parent=11 // pred_fallthru
          _
      $region12: #{tpu_custom_call.1} parent=5 // pred_fallthru
        _
      %p188 = scmp.lt.s32.totalorder %s21, 4
      // Predicated region
      $region21: #{tpu_custom_call.1} parent=5 // pred_check
        %p189 = pneg %p188
      $region22: #{tpu_custom_call.1} parent=5 // pred_check_branch
        %191 = sbr.rel (%p189) target = $region24
      $region23: #{tpu_custom_call.1} parent=5 // pred_region
        // Predicated region
        $region25: #{tpu_custom_call.1} parent=23 // pred_check
          %p192 = pneg %p55
        $region26: #{tpu_custom_call.1} parent=23 // pred_check_branch
          %194 = sbr.rel (%p192) target = $region28
        $region27: #{tpu_custom_call.1} parent=23 // pred_region
          %s195 = sand.u32 %s45, 1
          %s196 = scalar_lea.sflag [#allocation3], %s195
          %s197 = sand.u32 %s45, 1
          %s198 = smul.addr %s197, 128
          %s199 = scalar_lea.vmem [#allocation2], %s198
          %s200 = smul.u32 16, %s29
          %s202 = ssub.s32 2048, 2048
          %203 = vsyncadd %s196, %s202
          %s204 = smul.addr %s28, 32
          %s205 = sadd.s32 %s200, %s204
          %s206 = smul.addr %s205, 128
          %s207 = scalar_lea.hbm %s0, %s206
          %s208 = sshll.u32 %s199, 4
          %s209 = int_to_ptr.vmem [resolvable:$true] %s208
          %214 = dma.hbm_to_vmem [thread:$0]  %s207, 2048, %s209, %s196, 128, 128, 8
        $region28: #{tpu_custom_call.1} parent=23 // pred_fallthru
          _
      $region24: #{tpu_custom_call.1} parent=5 // pred_fallthru
        _
      %p215 = scmp.le.s32.totalorder 1, %s21
      %p216 = scmp.lt.s32.totalorder %s21, 5
      %p217 = pnand %p215, %p216
      %p218 = pneg %p217
      // Predicated region
      $region29: #{tpu_custom_call.1} parent=5 // pred_check
        _
      $region30: #{tpu_custom_call.1} parent=5 // pred_check_branch
        %220 = sbr.rel (%p217) target = $region32
      $region31: #{tpu_custom_call.1} parent=5 // pred_region
        %s221 = ssub.s32 %s21, 1
        %s222 = sand.u32 %s48, 1
        %s223 = scalar_lea.sflag [#allocation3], %s222
        %s224 = sand.u32 %s48, 1
        %s225 = smul.addr %s224, 128
        %s226 = scalar_lea.vmem [#allocation2], %s225
        // Predicated region
        $region33: #{tpu_custom_call.1} parent=31 // pred_check
          %p227 = pneg %p61
        $region34: #{tpu_custom_call.1} parent=31 // pred_check_branch
          %229 = sbr.rel (%p227) target = $region36
        $region35: #{tpu_custom_call.1} parent=31 // pred_region
          %230 = dma.done %s223, 2048
        $region36: #{tpu_custom_call.1} parent=31 // pred_fallthru
          _
        // Predicated region
        $region37: #{tpu_custom_call.1} parent=31 // pred_check
          %p231 = pneg %p82
        $region38: #{tpu_custom_call.1} parent=31 // pred_check_branch
          %233 = sbr.rel (%p231) target = $region40
        $region39: #{tpu_custom_call.1} parent=31 // pred_region
          %234 = dma.done [#allocation6], 2048
        $region40: #{tpu_custom_call.1} parent=31 // pred_fallthru
          _
        %s235 = sand.u32 %s48, 1
        %s236 = scalar_lea.sflag [#allocation3], %s235
        %s237 = sand.u32 %s48, 1
        %s238 = smul.addr %s237, 128
        %s239 = scalar_lea.vmem [#allocation2], %s238
        %p240 = pneg %p61
        %p241 = pneg %p58
        %p242 = pneg %p82
        %p243 = pneg %p79
        %p244 = pneg %p103
        %p245 = pneg %p100
        %p246 = pneg %p131
        %p247 = pneg %p128
        %s248 = sand.u32 %s118, 1
        %s249 = scalar_lea.sflag [#allocation4], %s248
        %s250 = sand.u32 %s118, 1
        %s251 = smul.addr %s250, 64
        %s252 = scalar_lea.vmem [#allocation7], %s251
        %p253 = pneg %p157
        %p254 = pneg %p154
        %s255 = sand.u32 %s144, 1
        %s256 = scalar_lea.sflag [#allocation9], %s255
        %s257 = sand.u32 %s144, 1
        %s258 = scalar_lea.vmem [#allocation8], %s257
        %s259 = smul.u32 16, %s31
        %s260 = smul.u32 16, %s31
        %p262 = scmp.eq.s32.totalorder %s31, 0
        // Predicated region
        $region41: #{tpu_custom_call.1} parent=31 // pred_check
          %p263 = pneg %p262
        $region42: #{tpu_custom_call.1} parent=31 // pred_check_branch
          %265 = sbr.rel (%p263) target = $region44
        $region43: #{tpu_custom_call.1} parent=31 // pred_region
          %266 = vst [vmem:[%s258] sm:$0x1] 0.0
        $region44: #{tpu_custom_call.1} parent=31 // pred_fallthru
          _
        %v267 = vld [vmem:[%s226] sm:$0xff]
        %v268 = vld [vmem:[%s226 + $0x8] sm:$0xff]
        %v269 = vld [vmem:[%s226 + $0x10] sm:$0xff]
        %v270 = vld [vmem:[%s226 + $0x18] sm:$0xff]
        %v271 = vld [vmem:[%s226 + $0x20] sm:$0xff]
        %v272 = vld [vmem:[%s226 + $0x28] sm:$0xff]
        %v273 = vld [vmem:[%s226 + $0x30] sm:$0xff]
        %v274 = vld [vmem:[%s226 + $0x38] sm:$0xff]
        %v275 = vld [vmem:[%s226 + $0x40] sm:$0xff]
        %v276 = vld [vmem:[%s226 + $0x48] sm:$0xff]
        %v277 = vld [vmem:[%s226 + $0x50] sm:$0xff]
        %v278 = vld [vmem:[%s226 + $0x58] sm:$0xff]
        %v279 = vld [vmem:[%s226 + $0x60] sm:$0xff]
        %v280 = vld [vmem:[%s226 + $0x68] sm:$0xff]
        %v281 = vld [vmem:[%s226 + $0x70] sm:$0xff]
        %v282 = vld [vmem:[%s226 + $0x78] sm:$0xff]
        %v283 = vpack.c.bf16 %v268, %v267
        %v284 = vpack.c.bf16 %v270, %v269
        %v285 = vpack.c.bf16 %v272, %v271
        %v286 = vpack.c.bf16 %v274, %v273
        %v287 = vpack.c.bf16 %v276, %v275
        %v288 = vpack.c.bf16 %v278, %v277
        %v289 = vpack.c.bf16 %v280, %v279
        %v290 = vpack.c.bf16 %v282, %v281
        %v291 = vld [vmem:[#allocation5] sm:$0xff]
        %v292 = vld [vmem:[#allocation5 + $0x8] sm:$0xff]
        %v293 = vld [vmem:[#allocation5 + $0x10] sm:$0xff]
        %v294 = vld [vmem:[#allocation5 + $0x18] sm:$0xff]
        %v295 = vld [vmem:[#allocation5 + $0x20] sm:$0xff]
        %v296 = vld [vmem:[#allocation5 + $0x28] sm:$0xff]
        %v297 = vld [vmem:[#allocation5 + $0x30] sm:$0xff]
        %v298 = vld [vmem:[#allocation5 + $0x38] sm:$0xff]
        %v299 = vld [vmem:[#allocation5 + $0x40] sm:$0xff]
        %v300 = vld [vmem:[#allocation5 + $0x48] sm:$0xff]
        %v301 = vld [vmem:[#allocation5 + $0x50] sm:$0xff]
        %v302 = vld [vmem:[#allocation5 + $0x58] sm:$0xff]
        %v303 = vld [vmem:[#allocation5 + $0x60] sm:$0xff]
        %v304 = vld [vmem:[#allocation5 + $0x68] sm:$0xff]
        %v305 = vld [vmem:[#allocation5 + $0x70] sm:$0xff]
        %v306 = vld [vmem:[#allocation5 + $0x78] sm:$0xff]
        %v307 = vld [vmem:[%s2] sm:$0x3]
        %v309 = vlaneseq
        %v310 = vshrl.u32 %v309, 7
        %v311 = vsub.s32 0, %v310
        %v312 = vrot.slane %v307, %v311
        %v313 = vlaneseq
        %v314 = vshrl.u32 %v313, 7
        %v315 = vsub.s32 1, %v314
        %v316 = vrot.slane %v307, %v315
        %v335 = vunpack.c.l.b16 %v291
        %v336 = vunpack.c.h.b16 %v291
        %v337 = vunpack.c.l.b16 %v292
        %v338 = vunpack.c.h.b16 %v292
        %v339 = vunpack.c.l.b16 %v293
        %v340 = vunpack.c.h.b16 %v293
        %v341 = vunpack.c.l.b16 %v294
        %v342 = vunpack.c.h.b16 %v294
        %v343 = vunpack.c.l.b16 %v295
        %v344 = vunpack.c.h.b16 %v295
        %v345 = vunpack.c.l.b16 %v296
        %v346 = vunpack.c.h.b16 %v296
        %v347 = vunpack.c.l.b16 %v297
        %v348 = vunpack.c.h.b16 %v297
        %v349 = vunpack.c.l.b16 %v298
        %v350 = vunpack.c.h.b16 %v298
        %v351 = vunpack.c.l.b16 %v299
        %v352 = vunpack.c.h.b16 %v299
        %v353 = vunpack.c.l.b16 %v300
        %v354 = vunpack.c.h.b16 %v300
        %v355 = vunpack.c.l.b16 %v301
        %v356 = vunpack.c.h.b16 %v301
        %v357 = vunpack.c.l.b16 %v302
        %v358 = vunpack.c.h.b16 %v302
        %v359 = vunpack.c.l.b16 %v303
        %v360 = vunpack.c.h.b16 %v303
        %v361 = vunpack.c.l.b16 %v304
        %v362 = vunpack.c.h.b16 %v304
        %v363 = vunpack.c.l.b16 %v305
        %v364 = vunpack.c.h.b16 %v305
        %v365 = vunpack.c.l.b16 %v306
        %v366 = vunpack.c.h.b16 %v306
        %v367 = vpack.c.b16 %v337, %v335
        %v368 = vpack.c.b16 %v338, %v336
        %v369 = vpack.c.b16 %v341, %v339
        %v370 = vpack.c.b16 %v342, %v340
        %v371 = vpack.c.b16 %v345, %v343
        %v372 = vpack.c.b16 %v346, %v344
        %v373 = vpack.c.b16 %v349, %v347
        %v374 = vpack.c.b16 %v350, %v348
        %v375 = vpack.c.b16 %v353, %v351
        %v376 = vpack.c.b16 %v354, %v352
        %v377 = vpack.c.b16 %v357, %v355
        %v378 = vpack.c.b16 %v358, %v356
        %v379 = vpack.c.b16 %v361, %v359
        %v380 = vpack.c.b16 %v362, %v360
        %v381 = vpack.c.b16 %v365, %v363
        %v382 = vpack.c.b16 %v366, %v364
        %399 = vmatprep.subr.bf16.mxu0 %v368
        %400 = vmatpush1.bf16.msra.mxu0 %v367
        %401 = vmatprep.subr.bf16.mxu0 %v370
        %402 = vmatpush1.bf16.msra.mxu0 %v369
        %403 = vmatprep.subr.bf16.mxu0 %v372
        %404 = vmatpush1.bf16.msra.mxu0 %v371
        %405 = vmatprep.subr.bf16.mxu0 %v374
        %406 = vmatpush1.bf16.msra.mxu0 %v373
        %407 = vmatprep.subr.bf16.mxu0 %v376
        %408 = vmatpush1.bf16.msra.mxu0 %v375
        %409 = vmatprep.subr.bf16.mxu0 %v378
        %410 = vmatpush1.bf16.msra.mxu0 %v377
        %411 = vmatprep.subr.bf16.mxu0 %v380
        %412 = vmatpush1.bf16.msra.mxu0 %v379
        %413 = vmatprep.subr.bf16.mxu0 %v382
        %414 = vmatpush1.bf16.msra.mxu0 %v381
        %415 = vmatprep.subr.bf16.mxu0 0
        %416 = vmatpush1.bf16.msra.mxu0 0
        %417 = vmatprep.subr.bf16.mxu0 0
        %418 = vmatpush1.bf16.msra.mxu0 0
        %419 = vmatprep.subr.bf16.mxu0 0
        %420 = vmatpush1.bf16.msra.mxu0 0
        %421 = vmatprep.subr.bf16.mxu0 0
        %422 = vmatpush1.bf16.msra.mxu0 0
        %423 = vmatprep.subr.bf16.mxu0 0
        %424 = vmatpush1.bf16.msra.mxu0 0
        %425 = vmatprep.subr.bf16.mxu0 0
        %426 = vmatpush1.bf16.msra.mxu0 0
        %427 = vmatprep.subr.bf16.mxu0 0
        %428 = vmatpush1.bf16.msra.mxu0 0
        %429 = vmatprep.subr.bf16.mxu0 0
        %430 = vmatpush1.bf16.msra.mxu0 0
        %431 = vmatprep.mubr.bf16.mxu0 0
        %432 = vmatmul.mubr.bf16.gmra.mrb[0].mxu0 %v283
        %v433 = vpop.f32.mrb[0].mxu0
        %v434 = vadd.f32 %v312, %v433
        %v435 = vpop.f32.mrb[0].mxu0
        %v436 = vadd.f32 %v316, %v435
        %v437 = vpop.f32.mrb[0].mxu0
        %v438 = vadd.f32 %v312, %v437
        %v439 = vpop.f32.mrb[0].mxu0
        %v440 = vadd.f32 %v316, %v439
        %441 = vmatprep.mubr.bf16.mxu0 0
        %442 = vmatmul.mubr.bf16.gmra.mrb[0].mxu0 %v284
        %v443 = vpop.f32.mrb[0].mxu0
        %v444 = vadd.f32 %v312, %v443
        %v445 = vpop.f32.mrb[0].mxu0
        %v446 = vadd.f32 %v316, %v445
        %v447 = vpop.f32.mrb[0].mxu0
        %v448 = vadd.f32 %v312, %v447
        %v449 = vpop.f32.mrb[0].mxu0
        %v450 = vadd.f32 %v316, %v449
        %451 = vmatprep.mubr.bf16.mxu0 0
        %452 = vmatmul.mubr.bf16.gmra.mrb[0].mxu0 %v285
        %v453 = vpop.f32.mrb[0].mxu0
        %v454 = vadd.f32 %v312, %v453
        %v455 = vpop.f32.mrb[0].mxu0
        %v456 = vadd.f32 %v316, %v455
        %v457 = vpop.f32.mrb[0].mxu0
        %v458 = vadd.f32 %v312, %v457
        %v459 = vpop.f32.mrb[0].mxu0
        %v460 = vadd.f32 %v316, %v459
        %461 = vmatprep.mubr.bf16.mxu0 0
        %462 = vmatmul.mubr.bf16.gmra.mrb[0].mxu0 %v286
        %v463 = vpop.f32.mrb[0].mxu0
        %v464 = vadd.f32 %v312, %v463
        %v465 = vpop.f32.mrb[0].mxu0
        %v466 = vadd.f32 %v316, %v465
        %v467 = vpop.f32.mrb[0].mxu0
        %v468 = vadd.f32 %v312, %v467
        %v469 = vpop.f32.mrb[0].mxu0
        %v470 = vadd.f32 %v316, %v469
        %471 = vmatprep.mubr.bf16.mxu0 0
        %472 = vmatmul.mubr.bf16.gmra.mrb[0].mxu0 %v287
        %v473 = vpop.f32.mrb[0].mxu0
        %v474 = vadd.f32 %v312, %v473
        %v475 = vpop.f32.mrb[0].mxu0
        %v476 = vadd.f32 %v316, %v475
        %v477 = vpop.f32.mrb[0].mxu0
        %v478 = vadd.f32 %v312, %v477
        %v479 = vpop.f32.mrb[0].mxu0
        %v480 = vadd.f32 %v316, %v479
        %481 = vmatprep.mubr.bf16.mxu0 0
        %482 = vmatmul.mubr.bf16.gmra.mrb[0].mxu0 %v288
        %v483 = vpop.f32.mrb[0].mxu0
        %v484 = vadd.f32 %v312, %v483
        %v485 = vpop.f32.mrb[0].mxu0
        %v486 = vadd.f32 %v316, %v485
        %v487 = vpop.f32.mrb[0].mxu0
        %v488 = vadd.f32 %v312, %v487
        %v489 = vpop.f32.mrb[0].mxu0
        %v490 = vadd.f32 %v316, %v489
        %491 = vmatprep.mubr.bf16.mxu0 0
        %492 = vmatmul.mubr.bf16.gmra.mrb[0].mxu0 %v289
        %v493 = vpop.f32.mrb[0].mxu0
        %v494 = vadd.f32 %v312, %v493
        %v495 = vpop.f32.mrb[0].mxu0
        %v496 = vadd.f32 %v316, %v495
        %v497 = vpop.f32.mrb[0].mxu0
        %v498 = vadd.f32 %v312, %v497
        %v499 = vpop.f32.mrb[0].mxu0
        %v500 = vadd.f32 %v316, %v499
        %501 = vmatprep.mubr.bf16.mxu0 0
        %502 = vmatmul.mubr.bf16.gmra.mrb[0].mxu0 %v290
        %v503 = vpop.f32.mrb[0].mxu0
        %v504 = vadd.f32 %v312, %v503
        %v505 = vpop.f32.mrb[0].mxu0
        %v506 = vadd.f32 %v316, %v505
        %v507 = vpop.f32.mrb[0].mxu0
        %v508 = vadd.f32 %v312, %v507
        %v509 = vpop.f32.mrb[0].mxu0
        %v510 = vadd.f32 %v316, %v509
        %511 = vdwg.mxu0
        %v512 = vpack.c.bf16 %v440, %v436
        %v513 = vpack.c.bf16 %v450, %v446
        %v514 = vpack.c.bf16 %v460, %v456
        %v515 = vpack.c.bf16 %v470, %v466
        %v516 = vpack.c.bf16 %v480, %v476
        %v517 = vpack.c.bf16 %v490, %v486
        %v518 = vpack.c.bf16 %v500, %v496
        %v519 = vpack.c.bf16 %v510, %v506
        %v528 = vunpack.c.l.b16 %v512
        %v529 = vunpack.c.h.b16 %v512
        %v530 = vunpack.c.l.b16 %v513
        %v531 = vunpack.c.h.b16 %v513
        %v532 = vunpack.c.l.b16 %v514
        %v533 = vunpack.c.h.b16 %v514
        %v534 = vunpack.c.l.b16 %v515
        %v535 = vunpack.c.h.b16 %v515
        %v536 = vunpack.c.l.b16 %v516
        %v537 = vunpack.c.h.b16 %v516
        %v538 = vunpack.c.l.b16 %v517
        %v539 = vunpack.c.h.b16 %v517
        %v540 = vunpack.c.l.b16 %v518
        %v541 = vunpack.c.h.b16 %v518
        %v542 = vunpack.c.l.b16 %v519
        %v543 = vunpack.c.h.b16 %v519
        %v544 = vpack.c.b16 %v528, %v528
        %v545 = vpack.c.b16 %v529, %v529
        %v546 = vpack.c.b16 %v530, %v530
        %v547 = vpack.c.b16 %v531, %v531
        %v548 = vpack.c.b16 %v532, %v532
        %v549 = vpack.c.b16 %v533, %v533
        %v550 = vpack.c.b16 %v534, %v534
        %v551 = vpack.c.b16 %v535, %v535
        %v552 = vpack.c.b16 %v536, %v536
        %v553 = vpack.c.b16 %v537, %v537
        %v554 = vpack.c.b16 %v538, %v538
        %v555 = vpack.c.b16 %v539, %v539
        %v556 = vpack.c.b16 %v540, %v540
        %v557 = vpack.c.b16 %v541, %v541
        %v558 = vpack.c.b16 %v542, %v542
        %v559 = vpack.c.b16 %v543, %v543
        %576 = vst [vmem:[%s252] sm:$0xf] %v544
        %577 = vst [vmem:[%s252 + $0x4] sm:$0xf] %v545
        %578 = vst [vmem:[%s252 + $0x8] sm:$0xf] %v546
        %579 = vst [vmem:[%s252 + $0xc] sm:$0xf] %v547
        %580 = vst [vmem:[%s252 + $0x10] sm:$0xf] %v548
        %581 = vst [vmem:[%s252 + $0x14] sm:$0xf] %v549
        %582 = vst [vmem:[%s252 + $0x18] sm:$0xf] %v550
        %583 = vst [vmem:[%s252 + $0x1c] sm:$0xf] %v551
        %584 = vst [vmem:[%s252 + $0x20] sm:$0xf] %v552
        %585 = vst [vmem:[%s252 + $0x24] sm:$0xf] %v553
        %586 = vst [vmem:[%s252 + $0x28] sm:$0xf] %v554
        %587 = vst [vmem:[%s252 + $0x2c] sm:$0xf] %v555
        %588 = vst [vmem:[%s252 + $0x30] sm:$0xf] %v556
        %589 = vst [vmem:[%s252 + $0x34] sm:$0xf] %v557
        %590 = vst [vmem:[%s252 + $0x38] sm:$0xf] %v558
        %591 = vst [vmem:[%s252 + $0x3c] sm:$0xf] %v559
        %v592 = vld [vmem:[%s258] sm:$0x1]
        %v593 = vmul.f32 %v434, %v436
        %v594 = vmul.f32 %v438, %v440
        %v595 = vmul.f32 %v444, %v446
        %v596 = vmul.f32 %v448, %v450
        %v597 = vmul.f32 %v454, %v456
        %v598 = vmul.f32 %v458, %v460
        %v599 = vmul.f32 %v464, %v466
        %v600 = vmul.f32 %v468, %v470
        %v601 = vmul.f32 %v474, %v476
        %v602 = vmul.f32 %v478, %v480
        %v603 = vmul.f32 %v484, %v486
        %v604 = vmul.f32 %v488, %v490
        %v605 = vmul.f32 %v494, %v496
        %v606 = vmul.f32 %v498, %v500
        %v607 = vmul.f32 %v504, %v506
        %v608 = vmul.f32 %v508, %v510
        %v609 = vadd.f32 %v593, %v594
        %v610 = vadd.f32 %v609, %v595
        %v611 = vadd.f32 %v610, %v596
        %v612 = vadd.f32 %v611, %v597
        %v613 = vadd.f32 %v612, %v598
        %v614 = vadd.f32 %v613, %v599
        %v615 = vadd.f32 %v614, %v600
        %v616 = vadd.f32 %v615, %v601
        %v617 = vadd.f32 %v616, %v602
        %v618 = vadd.f32 %v617, %v603
        %v619 = vadd.f32 %v618, %v604
        %v620 = vadd.f32 %v619, %v605
        %v621 = vadd.f32 %v620, %v606
        %v622 = vadd.f32 %v621, %v607
        %v623 = vadd.f32 %v622, %v608
        %v624 = vrot.slane %v623, 4
        %v625 = vadd.f32 %v623, %v624
        %v626 = vrot.slane %v625, 2
        %v627 = vadd.f32 %v625, %v626
        %v628 = vrot.slane %v627, 1
        %v629 = vadd.f32 %v627, %v628
        %v630 = vadd.f32 %v592, %v629
        %631 = vst [vmem:[%s258] sm:$0x1] %v630
        %s632 = sand.u32 %s118, 1
        %s633 = scalar_lea.sflag [#allocation4], %s632
        %s634 = sand.u32 %s118, 1
        %s635 = smul.addr %s634, 64
        %s636 = scalar_lea.vmem [#allocation7], %s635
        %s637 = sand.u32 %s144, 1
        %s638 = scalar_lea.sflag [#allocation9], %s637
        %s639 = sand.u32 %s144, 1
        %s640 = scalar_lea.vmem [#allocation8], %s639
        // Predicated region
        $region45: #{tpu_custom_call.1} parent=31 // pred_check
          %p641 = pneg %p128
        $region46: #{tpu_custom_call.1} parent=31 // pred_check_branch
          %643 = sbr.rel (%p641) target = $region48
        $region47: #{tpu_custom_call.1} parent=31 // pred_region
          %s644 = smul.u32 16, %s31
          %s646 = ssub.s32 1024, 1024
          %647 = vsyncadd %s633, %s646
          %s648 = smul.addr %s30, 32
          %s649 = sadd.s32 %s644, %s648
          %s650 = smul.addr %s649, 64
          %s651 = scalar_lea.hbm %s3, %s650
          %s652 = sshll.u32 %s636, 4
          %s653 = int_to_ptr.vmem [resolvable:$true] %s652
          %658 = dma.vmem_to_hbm [thread:$0]  %s653, 1024, %s651, %s633, 64, 64, 4
        $region48: #{tpu_custom_call.1} parent=31 // pred_fallthru
          _
        // Predicated region
        $region49: #{tpu_custom_call.1} parent=31 // pred_check
          %p659 = pneg %p154
        $region50: #{tpu_custom_call.1} parent=31 // pred_check_branch
          %661 = sbr.rel (%p659) target = $region52
        $region51: #{tpu_custom_call.1} parent=31 // pred_region
          %s663 = ssub.s32 16, 16
          %664 = vsyncadd %s638, %s663
          %s665 = smul.addr %s30, 16
          %s666 = scalar_lea.hbm %s4, %s665
          %s668 = sshll.u32 %s640, 4
          %s669 = int_to_ptr.vmem [resolvable:$true] %s668
          %671 = dma.vmem_to_hbm [thread:$0]  %s669, 16, %s666, %s638
        $region52: #{tpu_custom_call.1} parent=31 // pred_fallthru
          _
      $region32: #{tpu_custom_call.1} parent=5 // pred_fallthru
        _
      %p672 = scmp.le.s32.totalorder 2, %s21
      // Predicated region
      $region53: #{tpu_custom_call.1} parent=5 // pred_check
        %p673 = pneg %p672
      $region54: #{tpu_custom_call.1} parent=5 // pred_check_branch
        %675 = sbr.rel (%p673) target = $region56
      $region55: #{tpu_custom_call.1} parent=5 // pred_region
        %s676 = ssub.s32 %s21, 2
        // Predicated region
        $region57: #{tpu_custom_call.1} parent=55 // pred_check
          %p677 = pneg %p134
        $region58: #{tpu_custom_call.1} parent=55 // pred_check_branch
          %679 = sbr.rel (%p677) target = $region60
        $region59: #{tpu_custom_call.1} parent=55 // pred_region
          %s680 = sand.u32 %s119, 1
          %s681 = scalar_lea.sflag [#allocation4], %s680
          %s682 = sand.u32 %s119, 1
          %s683 = smul.addr %s682, 64
          %s684 = scalar_lea.vmem [#allocation7], %s683
          %685 = dma.done %s681, 1024
        $region60: #{tpu_custom_call.1} parent=55 // pred_fallthru
          _
        // Predicated region
        $region61: #{tpu_custom_call.1} parent=55 // pred_check
          %p686 = pneg %p160
        $region62: #{tpu_custom_call.1} parent=55 // pred_check_branch
          %688 = sbr.rel (%p686) target = $region64
        $region63: #{tpu_custom_call.1} parent=55 // pred_region
          %s689 = sand.u32 %s145, 1
          %s690 = scalar_lea.sflag [#allocation9], %s689
          %s691 = sand.u32 %s145, 1
          %s692 = scalar_lea.vmem [#allocation8], %s691
          %693 = dma.done %s690, 16
        $region64: #{tpu_custom_call.1} parent=55 // pred_fallthru
          _
      $region56: #{tpu_custom_call.1} parent=5 // pred_fallthru
        _
    $region6: #{tpu_custom_call.1} parent=1 // loop_footer
      %s25 = sadd.s32 1, %s21
    $region7: #{tpu_custom_call.1} parent=1 // loop_footer_branch
      %20 = sbr.rel target = $region3
    $region8: #{tpu_custom_call.1} parent=1 // loop_exit
      _
    %694 = vsyncpa [#allocation3], 1
    %s695 = scalar_lea.sflag [#allocation3], 1
    %696 = vsyncpa %s695, 1
    %697 = vsyncpa [#allocation6], 1
    %698 = vsyncpa [#allocation4], 1
    %s699 = scalar_lea.sflag [#allocation4], 1
    %700 = vsyncpa %s699, 1
    %701 = vsyncpa [#allocation9], 1
    %s702 = scalar_lea.sflag [#allocation9], 1
    %703 = vsyncpa %s702, 1

</llo_original>
